<compile_context>
chip_gen: v6e
topology: v6e:2x2x1
jax: 0.10.0
libtpu: 0.0.40
codegen_flags: <defaults>
</compile_context>

<pallas_src>
import functools

import jax
import jax.numpy as jnp
from jax.experimental import pallas as pl
from jax.experimental.pallas import tpu as pltpu


def _round_up(v: int, m: int) -> int:
    return ((v + m - 1) // m) * m


def _vmem_capacity_bytes() -> int:
    """Physical VMEM per TensorCore; conservative fallback if the query fails."""
    try:
        return int(pltpu.get_tpu_info().vmem_capacity_bytes)
    except Exception:
        return 64 * 1024 * 1024  # v7x per-TensorCore VMEM (smallest of v5e/v6e/v7x)


def _make_mlp_kernel(depth: int, separate_res: bool):
    """Kernel refs: x, (w, b) * depth, head_w_row, head_b, [res_w_row], out."""

    def kernel(*refs):
        x_ref = refs[0]
        out_ref = refs[-1]
        prm = refs[1:-1]

        # Hidden layers: statically unrolled (full LLO scheduler visibility).
        h = x_ref[...]
        for li in range(depth):
            w = prm[2 * li][...]                     # (in, width_pad)  param_dtype
            b = prm[2 * li + 1][...]                 # (1, width_pad)   f32
            h = jnp.dot(h.astype(w.dtype), w,
                        preferred_element_type=jnp.float32) + b
            h = jnp.maximum(h, 0.0)                  # bias-add / ReLU in f32

        idx = 2 * depth
        w_head = prm[idx][...]                       # (1, width_pad)   f32
        b_head = prm[idx + 1][...]                   # (1, 1)           f32
        # Head (width_pad -> 1) on VPU multiply + XLU lane-reduce, not the MXU.
        out = jnp.sum(h.astype(jnp.float32) * w_head, axis=-1, keepdims=True) + b_head

        if separate_res:
            # Residual Linear(input_dim, 1, bias=False) on standardized x,
            # also on VPU/XLU (avoids padding width_pad by +128 lanes just to
            # carry one scalar when width % 128 == 0 / 127).
            w_res = prm[idx + 2][...]                # (1, input_dim)   f32
            out = out + jnp.sum(x_ref[...].astype(jnp.float32) * w_res,
                                axis=-1, keepdims=True)

        out_ref[...] = out.astype(out_ref.dtype)

    return kernel


def nn_module_forward(x, x_mean, x_std, weights, biases, w_res, *, depth,
                      res_connect=True, tile_n=4096, param_dtype=jnp.float32,
                      weight_buffer_count=None):
    """NNModule.forward as a single batch-tiled Pallas kernel.

    Args:
      x:       (n, input_dim) float32.
      x_mean:  (1, input_dim) float32.
      x_std:   (1, input_dim) float32.
      weights: depth+1 arrays in (in, out) layout:
               (input_dim, width), (width, width)*(depth-1), (width, 1)
               (depth == 0: a single (input_dim, 1)).
      biases:  depth+1 arrays of shape (1, out).
      w_res:   (input_dim, 1) residual weight (ignored if not res_connect or depth==0).
      depth:   number of hidden layers (0 => plain linear model).
      tile_n:  max rows per grid step (auto-capped so the grid has >=2 steps
               and the VMEM footprint fits the current chip).
      param_dtype: dtype of x / hidden-layer weights fed to the MXU
               (float32 or bfloat16; bfloat16 is a win on v5e/v6e/v7x alike).
      weight_buffer_count: None = backend default (double-buffered resident
               weights); 1 = single-buffered via pl.Buffered(1) (halves weight
               VMEM — matters for large width on v7x's 64 MiB).

    Returns:
      (n, 1) float32 predictions.
    """
    # TODO(synk): add_bn=True (BatchNorm1d) and out_act are not implemented
    # (the module defaults add_bn=False / out_act=None are what is exercised).
    assert depth >= 0
    n, input_dim = x.shape
    num_layers = depth + 1
    assert len(weights) == num_layers and len(biases) == num_layers
    res_connect = bool(res_connect) and depth >= 1   # module forces False at depth == 0

    f32 = jnp.float32
    inv_std = 1.0 / x_std.astype(f32)                # (1, input_dim)
    shift = x_mean.astype(f32) * inv_std             # (1, input_dim)

    # ---- standardization -----------------------------------------------------
    # f32 operands: fold (x - mean)/std into the layer-1 weights (no extra pass
    # over the x stream).  Narrow operands (bf16): standardize in the wrapper
    # *before* casting so the quantization error is on (x-mean)/std, not raw x.
    fold_std = (param_dtype == jnp.float32)
    if fold_std:
        x_in = x.astype(f32)
        w1 = weights[0].astype(f32) * inv_std.reshape(-1, 1)
        b1 = biases[0].astype(f32) - shift @ weights[0].astype(f32)
        wr = (w_res.astype(f32) * inv_std.reshape(-1, 1)) if res_connect else None
        c_res = (-(shift @ w_res.astype(f32))) if res_connect else None
    else:
        x_in = ((x.astype(f32) - x_mean.astype(f32)) * inv_std).astype(param_dtype)
        w1 = weights[0].astype(f32)
        b1 = biases[0].astype(f32)
        wr = w_res.astype(f32) if res_connect else None
        c_res = jnp.zeros((1, 1), f32) if res_connect else None

    # ---- build padded, fused parameters ---------------------------------------
    hidden_ws, hidden_bs = [], []
    if depth == 0:
        width_pad = input_dim
        carry_res = separate_res = False
        head_row = w1.reshape(1, input_dim)
        b_head = b1.reshape(1, 1)
        res_row = None
    else:
        width = weights[0].shape[1]
        width_pad = _round_up(width, 128)            # lane-dense hidden width
        # Residual carry channels (relu(a), relu(-a) with a = xs @ w_res) only
        # if they fit inside the existing lane padding.
        carry_res = res_connect and (width + 2 <= width_pad)
        separate_res = res_connect and not carry_res

        # layer 1 (standardization fold and optional carry channels)
        w1p = jnp.zeros((input_dim, width_pad), f32).at[:, :width].set(w1)
        b1p = jnp.zeros((1, width_pad), f32).at[:, :width].set(b1)
        if carry_res:
            w1p = w1p.at[:, width].set(wr[:, 0]).at[:, width + 1].set(-wr[:, 0])
        hidden_ws.append(w1p)
        hidden_bs.append(b1p)

        # middle hidden layers
        for li in range(1, depth):
            wm = jnp.zeros((width_pad, width_pad), f32).at[:width, :width].set(
                weights[li].astype(f32))
            bm = jnp.zeros((1, width_pad), f32).at[:, :width].set(biases[li].astype(f32))
            if carry_res:          # carried channels are >= 0, so ReLU is identity
                wm = wm.at[width, width].set(1.0).at[width + 1, width + 1].set(1.0)
            hidden_ws.append(wm)
            hidden_bs.append(bm)

        # head (width_pad -> 1), evaluated on the VPU in the kernel
        head_row = jnp.zeros((1, width_pad), f32).at[0, :width].set(
            weights[depth].astype(f32)[:, 0])
        if carry_res:              # relu(a) - relu(-a) == a
            head_row = head_row.at[0, width].set(1.0).at[0, width + 1].set(-1.0)
        b_head = biases[depth].astype(f32).reshape(1, 1)
        if res_connect:
            b_head = b_head + c_res          # constant part of xs @ w_res
        res_row = wr.reshape(1, input_dim) if separate_res else None

    # MXU operands in param_dtype; biases / head row / residual row stay f32 so
    # every elementwise / VPU / XLU op is f32 (safe on v5e, which has no bf16 VPU).
    hidden_ws = [w.astype(param_dtype) for w in hidden_ws]

    param_args = []
    for w_, b_ in zip(hidden_ws, hidden_bs):
        param_args += [w_, b_]
    param_args += [head_row, b_head]
    if separate_res:
        param_args.append(res_row)

    # ---- row tiling ------------------------------------------------------------
    tile_n = int(max(8, min(tile_n, n)))
    if n > 8:
        # Keep >= 2 row tiles so ("parallel",) can shard the batch over both
        # v7x TensorCores and the DMA pipeline has more than one step.
        tile_n = min(tile_n, _round_up(pl.cdiv(n, 2), 8))
    if tile_n % 8 != 0 or tile_n > n:
        tile_n = n        # single full-extent block (exempt from the 8-row rule)

    # ---- VMEM budget (re-derived per chip; v7x has only 64 MiB / TC) -----------
    itemsize = jnp.dtype(param_dtype).itemsize
    param_bytes = sum(int(a.size) * a.dtype.itemsize for a in param_args)
    weight_copies = 2 if weight_buffer_count is None else max(1, int(weight_buffer_count))

    def _vmem_need(t):    # 2 x-tile buffers + 2 out-tile buffers + resident params
        return 2 * (t * input_dim * itemsize + t * 4) + weight_copies * param_bytes

    budget = (_vmem_capacity_bytes() * 3) // 4
    while tile_n > 512 and tile_n % 8 == 0 and _vmem_need(tile_n) > budget:
        tile_n = _round_up(max(tile_n // 2, 8), 8)
    vmem_limit = int(min(budget, max(32 << 20, _vmem_need(tile_n) + (4 << 20))))

    # ---- specs ------------------------------------------------------------------
    wb_kwargs = {}
    if weight_buffer_count is not None:
        # Constant index_map already skips re-DMA; Buffered(1) also removes the
        # second VMEM buffer copy of every resident weight.
        wb_kwargs["pipeline_mode"] = pl.Buffered(int(weight_buffer_count))

    in_specs = [pl.BlockSpec((tile_n, input_dim), lambda i: (i, 0))]
    for a in param_args:
        in_specs.append(pl.BlockSpec(a.shape, lambda i: (0, 0), **wb_kwargs))
    out_spec = pl.BlockSpec((tile_n, 1), lambda i: (i, 0))

    # ---- advisory cost estimate ---------------------------------------------------
    mm_flops = 0
    if depth >= 1:
        mm_flops = 2 * n * (input_dim * width_pad + (depth - 1) * width_pad * width_pad)
    head_flops = 2 * n * (width_pad if depth >= 1 else input_dim)
    res_flops = 2 * n * input_dim if separate_res else 0
    bytes_accessed = int(x_in.size) * x_in.dtype.itemsize + param_bytes + n * 4
    cost = pl.CostEstimate(flops=int(mm_flops + head_flops + res_flops),
                           transcendentals=0,
                           bytes_accessed=int(bytes_accessed))

    return pl.pallas_call(
        _make_mlp_kernel(depth, separate_res),
        out_shape=jax.ShapeDtypeStruct((n, 1), jnp.float32),
        grid=(pl.cdiv(n, tile_n),),
        in_specs=in_specs,
        out_specs=out_spec,
        compiler_params=pltpu.CompilerParams(
            dimension_semantics=("parallel",),   # shard row tiles over v7x's 2 TCs
            vmem_limit_bytes=vmem_limit,
        ),
        cost_estimate=cost,
    )(x_in, *param_args)


def init_params(key, input_dim, depth, width):
    """PyTorch-style init (uniform +-1/sqrt(fan_in)); weights stored as (in, out)."""
    dims_in = [input_dim] + [width] * depth
    dims_out = [width] * depth + [1] if depth >= 1 else [1]
    weights, biases = [], []
    for d_in, d_out in zip(dims_in, dims_out):
        key, kw, kb = jax.random.split(key, 3)
        bound = 1.0 / float(d_in) ** 0.5
        weights.append(jax.random.uniform(kw, (d_in, d_out), jnp.float32, -bound, bound))
        biases.append(jax.random.uniform(kb, (1, d_out), jnp.float32, -bound, bound))
    key, kr = jax.random.split(key)
    bound = 1.0 / float(input_dim) ** 0.5
    w_res = jax.random.uniform(kr, (input_dim, 1), jnp.float32, -bound, bound)
    return weights, biases, w_res


def reference_forward(x, x_mean, x_std, weights, biases, w_res, *, depth,
                      res_connect=True):
    xs = (x - x_mean) / x_std
    h = xs
    for li in range(depth):
        h = jnp.maximum(h @ weights[li] + biases[li], 0.0)
    out = h @ weights[depth] + biases[depth]
    if res_connect and depth >= 1:
        out = out + xs @ w_res
    return out


if __name__ == "__main__":
    key = jax.random.PRNGKey(0)

    # ---- Config A: depth=2, width=32 (residual carried in the lane padding) ----
    n, input_dim, depth, width = 256, 32, 2, 32
    key, kx, kp = jax.random.split(key, 3)
    x = jax.random.normal(kx, (n, input_dim), jnp.float32) * 1.7 + 0.3
    x_mean = jnp.mean(x, axis=0, keepdims=True)          # non-trivial statistics
    x_std = jnp.std(x, axis=0, keepdims=True)
    weights, biases, w_res = init_params(kp, input_dim, depth, width)
    ref = reference_forward(x, x_mean, x_std, weights, biases, w_res, depth=depth)

    # f32 path (tile auto-caps to 128 -> 2 grid steps; exercises the pipeline).
    fwd_f32 = jax.jit(functools.partial(nn_module_forward, depth=depth))
    out = jax.block_until_ready(fwd_f32(x, x_mean, x_std, weights, biases, w_res))
    assert out.shape == (n, 1)
    assert jnp.allclose(out, ref, atol=1e-4, rtol=1e-4), \
        float(jnp.max(jnp.abs(out - ref)))

    # bf16 MXU path (x standardized in the wrapper before the cast; tolerance
    # tightened vs. the previous 1e-1).
    fwd_bf16 = jax.jit(functools.partial(
        nn_module_forward, depth=depth, param_dtype=jnp.bfloat16))
    out_bf16 = jax.block_until_ready(
        fwd_bf16(x, x_mean, x_std, weights, biases, w_res))
    assert jnp.allclose(out_bf16, ref, atol=5e-2, rtol=5e-2), \
        float(jnp.max(jnp.abs(out_bf16 - ref)))

    # Optional single-buffered resident weights (pl.Buffered(1)).  Guarded:
    # pipeline_mode support varies across jax versions; fall back silently.
    try:
        fwd_sb = jax.jit(functools.partial(
            nn_module_forward, depth=depth, weight_buffer_count=1))
        out_sb = jax.block_until_ready(
            fwd_sb(x, x_mean, x_std, weights, biases, w_res))
        assert jnp.allclose(out_sb, ref, atol=1e-4, rtol=1e-4)
    except Exception:
        # TODO(synk): pl.Buffered(1) unsupported on this jax; weights stay double-buffered.
        pass

    # ---- Config B: width=128 (width % 128 == 0 -> separate VPU residual path) ----
    n2, id2, dep2, wid2 = 192, 16, 1, 128
    key, kx2, kp2 = jax.random.split(key, 3)
    x2 = jax.random.normal(kx2, (n2, id2), jnp.float32) * 0.9 - 0.4
    m2 = jnp.mean(x2, axis=0, keepdims=True)
    s2 = jnp.std(x2, axis=0, keepdims=True)
    w2, b2, wr2 = init_params(kp2, id2, dep2, wid2)
    ref2 = reference_forward(x2, m2, s2, w2, b2, wr2, depth=dep2)
    out2 = jax.block_until_ready(jax.jit(functools.partial(
        nn_module_forward, depth=dep2))(x2, m2, s2, w2, b2, wr2))
    assert out2.shape == (n2, 1)
    assert jnp.allclose(out2, ref2, atol=1e-3, rtol=1e-3), \
        float(jnp.max(jnp.abs(out2 - ref2)))

    # ---- Config C: depth=0 (plain linear model, residual disabled by module) ----
    n3, id3 = 64, 16
    key, kx3, kp3 = jax.random.split(key, 3)
    x3 = jax.random.normal(kx3, (n3, id3), jnp.float32) + 1.1
    m3 = jnp.mean(x3, axis=0, keepdims=True)
    s3 = jnp.std(x3, axis=0, keepdims=True)
    w3, b3, wr3 = init_params(kp3, id3, 0, 0)
    ref3 = reference_forward(x3, m3, s3, w3, b3, wr3, depth=0, res_connect=False)
    out3 = jax.block_until_ready(jax.jit(functools.partial(
        nn_module_forward, depth=0))(x3, m3, s3, w3, b3, wr3))
    assert out3.shape == (n3, 1)
    assert jnp.allclose(out3, ref3, atol=1e-4, rtol=1e-4), \
        float(jnp.max(jnp.abs(out3 - ref3)))

    print("KERNEL_OK")
</pallas_src>

<mosaic_0001>
module attributes {stable_mosaic.version = 11 : i64} {
  func.func @kernel(%arg0: i32, %arg1: memref<128x32xf32, #tpu.memory_space<vmem>>, %arg2: memref<32x128xf32, #tpu.memory_space<vmem>>, %arg3: memref<1x128xf32, #tpu.memory_space<vmem>>, %arg4: memref<128x128xf32, #tpu.memory_space<vmem>>, %arg5: memref<1x128xf32, #tpu.memory_space<vmem>>, %arg6: memref<1x128xf32, #tpu.memory_space<vmem>>, %arg7: memref<1x1xf32, #tpu.memory_space<vmem>>, %arg8: memref<128x1xf32, #tpu.memory_space<vmem>>) attributes {dimension_semantics = [#tpu.dimension_semantics<parallel>], iteration_bounds = array<i64: 2>, scalar_prefetch = 0 : i64, scratch_operands = 0 : i64, tpu.core_type = #tpu.core_type<tc>, window_params = [{transform_indices = @transform_0, window_bounds = array<i64: 128, 32>}, {pipeline_mode = #tpu.pipeline_mode<synchronous>, transform_indices = @transform_1, window_bounds = array<i64: 32, 128>}, {pipeline_mode = #tpu.pipeline_mode<synchronous>, transform_indices = @transform_2, window_bounds = array<i64: 1, 128>}, {pipeline_mode = #tpu.pipeline_mode<synchronous>, transform_indices = @transform_3, window_bounds = array<i64: 128, 128>}, {pipeline_mode = #tpu.pipeline_mode<synchronous>, transform_indices = @transform_4, window_bounds = array<i64: 1, 128>}, {pipeline_mode = #tpu.pipeline_mode<synchronous>, transform_indices = @transform_5, window_bounds = array<i64: 1, 128>}, {pipeline_mode = #tpu.pipeline_mode<synchronous>, transform_indices = @transform_6, window_bounds = array<i64: 1, 1>}, {transform_indices = @transform_7, window_bounds = array<i64: 128, 1>}]} {
    %c0 = arith.constant 0 : index
    %c0_0 = arith.constant 0 : index
    %0 = vector.load %arg1[%c0, %c0_0] : memref<128x32xf32, #tpu.memory_space<vmem>>, vector<128x32xf32>
    %c0_1 = arith.constant 0 : index
    %c0_2 = arith.constant 0 : index
    %1 = vector.load %arg2[%c0_1, %c0_2] : memref<32x128xf32, #tpu.memory_space<vmem>>, vector<32x128xf32>
    %c0_3 = arith.constant 0 : index
    %c0_4 = arith.constant 0 : index
    %2 = vector.load %arg3[%c0_3, %c0_4] : memref<1x128xf32, #tpu.memory_space<vmem>>, vector<1x128xf32>
    %cst = arith.constant dense<0.000000e+00> : vector<128x128xf32>
    %3 = tpu.matmul %0, %1, %cst {dimension_numbers = #tpu.dot_dimension_numbers<[1], [0], [0], [1], [0, 0, 1, 1], [], []>} : vector<128x32xf32>, vector<32x128xf32>, vector<128x128xf32> -> vector<128x128xf32>
    %4 = vector.broadcast %2 : vector<1x128xf32> to vector<128x128xf32>
    %5 = arith.addf %3, %4 : vector<128x128xf32>
    %cst_5 = arith.constant 0.000000e+00 : f32
    %6 = vector.broadcast %cst_5 : f32 to vector<128x128xf32>
    %7 = arith.maximumf %5, %6 : vector<128x128xf32>
    %c0_6 = arith.constant 0 : index
    %c0_7 = arith.constant 0 : index
    %8 = vector.load %arg4[%c0_6, %c0_7] : memref<128x128xf32, #tpu.memory_space<vmem>>, vector<128x128xf32>
    %c0_8 = arith.constant 0 : index
    %c0_9 = arith.constant 0 : index
    %9 = vector.load %arg5[%c0_8, %c0_9] : memref<1x128xf32, #tpu.memory_space<vmem>>, vector<1x128xf32>
    %cst_10 = arith.constant dense<0.000000e+00> : vector<128x128xf32>
    %10 = tpu.matmul %7, %8, %cst_10 {dimension_numbers = #tpu.dot_dimension_numbers<[1], [0], [0], [1], [0, 0, 1, 1], [], []>} : vector<128x128xf32>, vector<128x128xf32>, vector<128x128xf32> -> vector<128x128xf32>
    %11 = vector.broadcast %9 : vector<1x128xf32> to vector<128x128xf32>
    %12 = arith.addf %10, %11 : vector<128x128xf32>
    %cst_11 = arith.constant 0.000000e+00 : f32
    %13 = vector.broadcast %cst_11 : f32 to vector<128x128xf32>
    %14 = arith.maximumf %12, %13 : vector<128x128xf32>
    %c0_12 = arith.constant 0 : index
    %c0_13 = arith.constant 0 : index
    %15 = vector.load %arg6[%c0_12, %c0_13] : memref<1x128xf32, #tpu.memory_space<vmem>>, vector<1x128xf32>
    %c0_14 = arith.constant 0 : index
    %c0_15 = arith.constant 0 : index
    %16 = vector.load %arg7[%c0_14, %c0_15] : memref<1x1xf32, #tpu.memory_space<vmem>>, vector<1x1xf32>
    %17 = vector.broadcast %15 : vector<1x128xf32> to vector<128x128xf32>
    %18 = arith.mulf %14, %17 : vector<128x128xf32>
    %cst_16 = arith.constant dense<0.000000e+00> : vector<128xf32>
    %19 = vector.multi_reduction <add>, %18, %cst_16 [1] : vector<128x128xf32> to vector<128xf32>
    %20 = vector.shape_cast %19 : vector<128xf32> to vector<128x1xf32>
    %21 = vector.broadcast %16 : vector<1x1xf32> to vector<128x1xf32>
    %22 = arith.addf %20, %21 : vector<128x1xf32>
    %c0_17 = arith.constant 0 : index
    %c0_18 = arith.constant 0 : index
    %23 = vector.load %arg8[%c0_17, %c0_18] : memref<128x1xf32, #tpu.memory_space<vmem>>, vector<128x1xf32>
    tpu.vector_store %arg8[%c0_17, %c0_18], %22 {strides = array<i32>} : memref<128x1xf32, #tpu.memory_space<vmem>>, vector<128x1xf32>,
    return
  }
  func.func @transform_0(%arg0: i32) -> (i32, i32) {
    %c0_i32 = arith.constant 0 : i32
    %c0_i32_0 = arith.constant 0 : i32
    return %arg0, %c0_i32 : i32, i32
  }
  func.func @transform_1(%arg0: i32) -> (i32, i32) {
    %c0_i32 = arith.constant 0 : i32
    %c0_i32_0 = arith.constant 0 : i32
    %c0_i32_1 = arith.constant 0 : i32
    return %c0_i32, %c0_i32_0 : i32, i32
  }
  func.func @transform_2(%arg0: i32) -> (i32, i32) {
    %c0_i32 = arith.constant 0 : i32
    %c0_i32_0 = arith.constant 0 : i32
    %c0_i32_1 = arith.constant 0 : i32
    return %c0_i32, %c0_i32_0 : i32, i32
  }
  func.func @transform_3(%arg0: i32) -> (i32, i32) {
    %c0_i32 = arith.constant 0 : i32
    %c0_i32_0 = arith.constant 0 : i32
    %c0_i32_1 = arith.constant 0 : i32
    return %c0_i32, %c0_i32_0 : i32, i32
  }
  func.func @transform_4(%arg0: i32) -> (i32, i32) {
    %c0_i32 = arith.constant 0 : i32
    %c0_i32_0 = arith.constant 0 : i32
    %c0_i32_1 = arith.constant 0 : i32
    return %c0_i32, %c0_i32_0 : i32, i32
  }
  func.func @transform_5(%arg0: i32) -> (i32, i32) {
    %c0_i32 = arith.constant 0 : i32
    %c0_i32_0 = arith.constant 0 : i32
    %c0_i32_1 = arith.constant 0 : i32
    return %c0_i32, %c0_i32_0 : i32, i32
  }
  func.func @transform_6(%arg0: i32) -> (i32, i32) {
    %c0_i32 = arith.constant 0 : i32
    %c0_i32_0 = arith.constant 0 : i32
    %c0_i32_1 = arith.constant 0 : i32
    return %c0_i32, %c0_i32_0 : i32, i32
  }
  func.func @transform_7(%arg0: i32) -> (i32, i32) {
    %c0_i32 = arith.constant 0 : i32
    %c0_i32_0 = arith.constant 0 : i32
    return %arg0, %c0_i32 : i32, i32
  }
}

</mosaic_0001>

<llo_original>
// kernel: nn_module_forward.1
$region0: #{nn_module_forward.1}
  #allocation0 [shape = 'u32[]', space=smem, size = 0x4, offset = 0x4, fixed_abs, tag = 'smem constant byte address 0x4 - core index']
  #allocation1 [shape = 'u32[144,128]{1,0:T(1,128)}', space=vmem, size = 0x12000, scoped, tag = 'internal scratch']
  #allocation2 [shape = 'f32[1,1]{1,0:T(1,128)S(1)}', space=vmem, size = 0x200, scoped, tag = 'scoped memory for nn_module_forward.1']
  %s0 = inlined_call_operand.vmem [shape: f32[256,32], index: 0, kind: input, shape index: {}]
  %s1 = inlined_call_operand.vmem [shape: f32[32,128], index: 1, kind: input, shape index: {}]
  %s2 = inlined_call_operand.vmem [shape: f32[1,128], index: 2, kind: input, shape index: {}]
  %s3 = inlined_call_operand.vmem [shape: f32[128,128], index: 3, kind: input, shape index: {}]
  %s4 = inlined_call_operand.vmem [shape: f32[1,128], index: 4, kind: input, shape index: {}]
  %s5 = inlined_call_operand.vmem [shape: f32[1,128], index: 5, kind: input, shape index: {}]
  %s6 = inlined_call_operand.<no memory space> [shape: f32[1,1], index: 6, kind: input, shape index: {}]
  %s7 = inlined_call_operand.vmem [shape: f32[256,1], index: 7, kind: output, shape index: {}]
  %s8 = sld [smem:[#allocation0]]
  $region61: #{nn_module_forward.1} parent=0
    _
  %s10 = ssub.s32 1, %s8
  %s11 = scalar_select 0, %s10, %s8
  %v12 = vstv %s6
  %13 = vst [vmem:[#allocation2] sm:$0x1] %v12
  loop: start=0, step=1, limit=4
  $region2: #{nn_module_forward.1} parent=0 // loop_pre_header
    _
  $region3: #{nn_module_forward.1} parent=0 // loop_header
    %s15 = sphi 0, %s19
    %p16 = scmp.ge.s32.totalorder %s15, 4
    %s25 = sphi 0, %s27
    %s28 = sphi 0, %s25
    %s29 = sphi 0, %s28
    %s45 = sphi 0, %s29
    %s49 = sphi 0, %s49
    %s51 = sphi 0, %s49
    %s52 = sphi 0, %s51
    %s66 = sphi 0, %s52
    %s70 = sphi 0, %s70
    %s72 = sphi 0, %s70
    %s73 = sphi 0, %s72
    %s87 = sphi 0, %s73
    %s91 = sphi 0, %s91
    %s93 = sphi 0, %s91
    %s94 = sphi 0, %s93
    %s108 = sphi 0, %s94
    %s112 = sphi 0, %s112
    %s114 = sphi 0, %s112
    %s115 = sphi 0, %s114
    %s129 = sphi 0, %s115
    %s133 = sphi 0, %s133
    %s135 = sphi 0, %s133
    %s136 = sphi 0, %s135
    %s150 = sphi 0, %s136
    %s154 = sphi 0, %s154
    %s156 = sphi 0, %s154
    %s157 = sphi 0, %s156
    %s171 = sphi 0, %s157
    %s177 = sphi 0, %s179
    %s180 = sphi 0, %s177
    %s181 = sphi 0, %s180
    %s197 = sphi 0, %s181
  $region4: #{nn_module_forward.1} parent=0 // loop_header_branch
    %18 = sbr.rel (%p16) target = $region8
  $region5: #{nn_module_forward.1} parent=0 // loop_body
    %s20 = ssub.s32 %s15, 1
    %s21 = ssub.s32 %s15, 2
    %s22 = sadd.s32 %s15, 1
    %s23 = ssub.s32 %s15, %s22
    %p24 = scmp.eq.s32.totalorder %s23, 0
    %s26 = sadd.s32 %s25, 1
    %s27 = scalar_select %p24, %s25, %s26
    %p30 = pneg %p24
    %p31 = scmp.eq.s32.totalorder %s15, 1
    %p32 = por %p30, %p31
    %p33 = scmp.ne.s32.totalorder %s25, %s28
    %p34 = scmp.eq.s32.totalorder %s15, 0
    %p35 = por %p33, %p34
    %p36 = scmp.ne.s32.totalorder %s25, %s28
    %p37 = scmp.eq.s32.totalorder %s20, 1
    %p38 = por %p36, %p37
    %p39 = scmp.ne.s32.totalorder %s28, %s29
    %p40 = scmp.eq.s32.totalorder %s20, 0
    %p41 = por %p39, %p40
    %p42 = scmp.ne.s32.totalorder %s28, %s29
    %p43 = scmp.eq.s32.totalorder %s21, 1
    %p44 = por %p42, %p43
    %p46 = scmp.ne.s32.totalorder %s29, %s45
    %p47 = scmp.eq.s32.totalorder %s21, 0
    %p48 = por %p46, %p47
    %s50 = sadd.s32 %s49, 1
    %p53 = scmp.eq.s32.totalorder %s15, 1
    %p54 = scmp.ne.s32.totalorder %s49, %s51
    %p55 = scmp.eq.s32.totalorder %s15, 0
    %p56 = por %p54, %p55
    %p57 = scmp.ne.s32.totalorder %s49, %s51
    %p58 = scmp.eq.s32.totalorder %s20, 1
    %p59 = por %p57, %p58
    %p60 = scmp.ne.s32.totalorder %s51, %s52
    %p61 = scmp.eq.s32.totalorder %s20, 0
    %p62 = por %p60, %p61
    %p63 = scmp.ne.s32.totalorder %s51, %s52
    %p64 = scmp.eq.s32.totalorder %s21, 1
    %p65 = por %p63, %p64
    %p67 = scmp.ne.s32.totalorder %s52, %s66
    %p68 = scmp.eq.s32.totalorder %s21, 0
    %p69 = por %p67, %p68
    %s71 = sadd.s32 %s70, 1
    %p74 = scmp.eq.s32.totalorder %s15, 1
    %p75 = scmp.ne.s32.totalorder %s70, %s72
    %p76 = scmp.eq.s32.totalorder %s15, 0
    %p77 = por %p75, %p76
    %p78 = scmp.ne.s32.totalorder %s70, %s72
    %p79 = scmp.eq.s32.totalorder %s20, 1
    %p80 = por %p78, %p79
    %p81 = scmp.ne.s32.totalorder %s72, %s73
    %p82 = scmp.eq.s32.totalorder %s20, 0
    %p83 = por %p81, %p82
    %p84 = scmp.ne.s32.totalorder %s72, %s73
    %p85 = scmp.eq.s32.totalorder %s21, 1
    %p86 = por %p84, %p85
    %p88 = scmp.ne.s32.totalorder %s73, %s87
    %p89 = scmp.eq.s32.totalorder %s21, 0
    %p90 = por %p88, %p89
    %s92 = sadd.s32 %s91, 1
    %p95 = scmp.eq.s32.totalorder %s15, 1
    %p96 = scmp.ne.s32.totalorder %s91, %s93
    %p97 = scmp.eq.s32.totalorder %s15, 0
    %p98 = por %p96, %p97
    %p99 = scmp.ne.s32.totalorder %s91, %s93
    %p100 = scmp.eq.s32.totalorder %s20, 1
    %p101 = por %p99, %p100
    %p102 = scmp.ne.s32.totalorder %s93, %s94
    %p103 = scmp.eq.s32.totalorder %s20, 0
    %p104 = por %p102, %p103
    %p105 = scmp.ne.s32.totalorder %s93, %s94
    %p106 = scmp.eq.s32.totalorder %s21, 1
    %p107 = por %p105, %p106
    %p109 = scmp.ne.s32.totalorder %s94, %s108
    %p110 = scmp.eq.s32.totalorder %s21, 0
    %p111 = por %p109, %p110
    %s113 = sadd.s32 %s112, 1
    %p116 = scmp.eq.s32.totalorder %s15, 1
    %p117 = scmp.ne.s32.totalorder %s112, %s114
    %p118 = scmp.eq.s32.totalorder %s15, 0
    %p119 = por %p117, %p118
    %p120 = scmp.ne.s32.totalorder %s112, %s114
    %p121 = scmp.eq.s32.totalorder %s20, 1
    %p122 = por %p120, %p121
    %p123 = scmp.ne.s32.totalorder %s114, %s115
    %p124 = scmp.eq.s32.totalorder %s20, 0
    %p125 = por %p123, %p124
    %p126 = scmp.ne.s32.totalorder %s114, %s115
    %p127 = scmp.eq.s32.totalorder %s21, 1
    %p128 = por %p126, %p127
    %p130 = scmp.ne.s32.totalorder %s115, %s129
    %p131 = scmp.eq.s32.totalorder %s21, 0
    %p132 = por %p130, %p131
    %s134 = sadd.s32 %s133, 1
    %p137 = scmp.eq.s32.totalorder %s15, 1
    %p138 = scmp.ne.s32.totalorder %s133, %s135
    %p139 = scmp.eq.s32.totalorder %s15, 0
    %p140 = por %p138, %p139
    %p141 = scmp.ne.s32.totalorder %s133, %s135
    %p142 = scmp.eq.s32.totalorder %s20, 1
    %p143 = por %p141, %p142
    %p144 = scmp.ne.s32.totalorder %s135, %s136
    %p145 = scmp.eq.s32.totalorder %s20, 0
    %p146 = por %p144, %p145
    %p147 = scmp.ne.s32.totalorder %s135, %s136
    %p148 = scmp.eq.s32.totalorder %s21, 1
    %p149 = por %p147, %p148
    %p151 = scmp.ne.s32.totalorder %s136, %s150
    %p152 = scmp.eq.s32.totalorder %s21, 0
    %p153 = por %p151, %p152
    %s155 = sadd.s32 %s154, 1
    %p158 = scmp.eq.s32.totalorder %s15, 1
    %p159 = scmp.ne.s32.totalorder %s154, %s156
    %p160 = scmp.eq.s32.totalorder %s15, 0
    %p161 = por %p159, %p160
    %p162 = scmp.ne.s32.totalorder %s154, %s156
    %p163 = scmp.eq.s32.totalorder %s20, 1
    %p164 = por %p162, %p163
    %p165 = scmp.ne.s32.totalorder %s156, %s157
    %p166 = scmp.eq.s32.totalorder %s20, 0
    %p167 = por %p165, %p166
    %p168 = scmp.ne.s32.totalorder %s156, %s157
    %p169 = scmp.eq.s32.totalorder %s21, 1
    %p170 = por %p168, %p169
    %p172 = scmp.ne.s32.totalorder %s157, %s171
    %p173 = scmp.eq.s32.totalorder %s21, 0
    %p174 = por %p172, %p173
    %s175 = ssub.s32 %s15, %s22
    %p176 = scmp.eq.s32.totalorder %s175, 0
    %s178 = sadd.s32 %s177, 1
    %s179 = scalar_select %p176, %s177, %s178
    %p182 = pneg %p176
    %p183 = scmp.eq.s32.totalorder %s15, 1
    %p184 = por %p182, %p183
    %p185 = scmp.ne.s32.totalorder %s177, %s180
    %p186 = scmp.eq.s32.totalorder %s15, 0
    %p187 = por %p185, %p186
    %p188 = scmp.ne.s32.totalorder %s177, %s180
    %p189 = scmp.eq.s32.totalorder %s20, 1
    %p190 = por %p188, %p189
    %p191 = scmp.ne.s32.totalorder %s180, %s181
    %p192 = scmp.eq.s32.totalorder %s20, 0
    %p193 = por %p191, %p192
    %p194 = scmp.ne.s32.totalorder %s180, %s181
    %p195 = scmp.eq.s32.totalorder %s21, 1
    %p196 = por %p194, %p195
    %p198 = scmp.ne.s32.totalorder %s181, %s197
    %p199 = scmp.eq.s32.totalorder %s21, 0
    %p200 = por %p198, %p199
    %p201 = scmp.le.s32.totalorder 1, %s15
    %p202 = scmp.lt.s32.totalorder %s15, 3
    %p203 = pnand %p201, %p202
    %p204 = pneg %p203
    // Predicated region
    $region9: #{nn_module_forward.1} parent=5 // pred_check
      _
    $region10: #{nn_module_forward.1} parent=5 // pred_check_branch
      %206 = sbr.rel (%p203) target = $region12
    $region11: #{nn_module_forward.1} parent=5 // pred_region
      %s207 = ssub.s32 %s15, 1
      // Predicated region
      $region13: #{nn_module_forward.1} parent=11 // pred_check
        %p208 = pneg %p62
      $region14: #{nn_module_forward.1} parent=11 // pred_check_branch
        %210 = sbr.rel (%p208) target = $region16
      $region15: #{nn_module_forward.1} parent=11 // pred_region
        _
      $region16: #{nn_module_forward.1} parent=11 // pred_fallthru
        _
      // Predicated region
      $region17: #{nn_module_forward.1} parent=11 // pred_check
        %p211 = pneg %p83
      $region18: #{nn_module_forward.1} parent=11 // pred_check_branch
        %213 = sbr.rel (%p211) target = $region20
      $region19: #{nn_module_forward.1} parent=11 // pred_region
        _
      $region20: #{nn_module_forward.1} parent=11 // pred_fallthru
        _
      // Predicated region
      $region21: #{nn_module_forward.1} parent=11 // pred_check
        %p214 = pneg %p104
      $region22: #{nn_module_forward.1} parent=11 // pred_check_branch
        %216 = sbr.rel (%p214) target = $region24
      $region23: #{nn_module_forward.1} parent=11 // pred_region
        _
      $region24: #{nn_module_forward.1} parent=11 // pred_fallthru
        _
      // Predicated region
      $region25: #{nn_module_forward.1} parent=11 // pred_check
        %p217 = pneg %p125
      $region26: #{nn_module_forward.1} parent=11 // pred_check_branch
        %219 = sbr.rel (%p217) target = $region28
      $region27: #{nn_module_forward.1} parent=11 // pred_region
        _
      $region28: #{nn_module_forward.1} parent=11 // pred_fallthru
        _
      // Predicated region
      $region29: #{nn_module_forward.1} parent=11 // pred_check
        %p220 = pneg %p146
      $region30: #{nn_module_forward.1} parent=11 // pred_check_branch
        %222 = sbr.rel (%p220) target = $region32
      $region31: #{nn_module_forward.1} parent=11 // pred_region
        _
      $region32: #{nn_module_forward.1} parent=11 // pred_fallthru
        _
      // Predicated region
      $region33: #{nn_module_forward.1} parent=11 // pred_check
        %p223 = pneg %p167
      $region34: #{nn_module_forward.1} parent=11 // pred_check_branch
        %225 = sbr.rel (%p223) target = $region36
      $region35: #{nn_module_forward.1} parent=11 // pred_region
        _
      $region36: #{nn_module_forward.1} parent=11 // pred_fallthru
        _
    $region12: #{nn_module_forward.1} parent=5 // pred_fallthru
      _
    %p226 = scmp.lt.s32.totalorder %s15, 2
    // Predicated region
    $region37: #{nn_module_forward.1} parent=5 // pred_check
      %p227 = pneg %p226
    $region38: #{nn_module_forward.1} parent=5 // pred_check_branch
      %229 = sbr.rel (%p227) target = $region40
    $region39: #{nn_module_forward.1} parent=5 // pred_region
      // Predicated region
      $region41: #{nn_module_forward.1} parent=39 // pred_check
        %p230 = pneg %p35
      $region42: #{nn_module_forward.1} parent=39 // pred_check_branch
        %232 = sbr.rel (%p230) target = $region44
      $region43: #{nn_module_forward.1} parent=39 // pred_region
        %s233 = smul.u32 16, %s15
        %p234 = scmp.lt.s32.totalorder %s233, 31
        %s235 = scalar_select %p234, %s233, 31
        %s236 = smul.addr %s235, 8
        %s237 = scalar_lea.vmem %s0, %s236
        %s238 = smul.u32 16, %s15
      $region44: #{nn_module_forward.1} parent=39 // pred_fallthru
        _
    $region40: #{nn_module_forward.1} parent=5 // pred_fallthru
      _
    %p239 = scmp.le.s32.totalorder 1, %s15
    %p240 = scmp.lt.s32.totalorder %s15, 3
    %p241 = pnand %p239, %p240
    %p242 = pneg %p241
    // Predicated region
    $region45: #{nn_module_forward.1} parent=5 // pred_check
      _
    $region46: #{nn_module_forward.1} parent=5 // pred_check_branch
      %244 = sbr.rel (%p241) target = $region48
    $region47: #{nn_module_forward.1} parent=5 // pred_region
      %s245 = ssub.s32 %s15, 1
      %s246 = smul.u32 16, %s20
      %p247 = scmp.lt.s32.totalorder %s246, 31
      %s248 = scalar_select %p247, %s246, 31
      %s249 = smul.addr %s248, 8
      %s250 = scalar_lea.vmem %s0, %s249
      %p251 = pneg %p41
      %p252 = pneg %p38
      %p253 = pneg %p62
      %p254 = pneg %p59
      %p255 = pneg %p83
      %p256 = pneg %p80
      %p257 = pneg %p104
      %p258 = pneg %p101
      %p259 = pneg %p125
      %p260 = pneg %p122
      %p261 = pneg %p146
      %p262 = pneg %p143
      %p263 = pneg %p167
      %p264 = pneg %p164
      %p265 = pneg %p193
      %p266 = pneg %p190
      %s267 = smul.u32 16, %s20
      %p268 = scmp.lt.s32.totalorder %s267, 31
      %s269 = scalar_select %p268, %s267, 31
      %s270 = smul.addr %s269, 8
      %s271 = scalar_lea.vmem %s7, %s270
      %s272 = smul.u32 16, %s20
      %p273 = scmp.lt.s32.totalorder %s272, 31
      %s274 = scalar_select %p273, %s272, 31
      %s275 = smul.addr %s274, 8
      %s276 = scalar_lea.vmem %s0, %s275
      %s277 = smul.u32 16, %s20
      %s278 = smul.u32 16, %s20
      %p279 = scmp.lt.s32.totalorder %s278, 31
      %s280 = scalar_select %p279, %s278, 31
      %s281 = smul.addr %s280, 8
      %s282 = scalar_lea.vmem %s7, %s281
      %s283 = smul.u32 16, %s20
      %v284 = vld [vmem:[%s276] sm:$0xff]
      %v285 = vld [vmem:[%s276 + $0x8] sm:$0xff]
      %v286 = vld [vmem:[%s276 + $0x10] sm:$0xff]
      %v287 = vld [vmem:[%s276 + $0x18] sm:$0xff]
      %v288 = vld [vmem:[%s276 + $0x20] sm:$0xff]
      %v289 = vld [vmem:[%s276 + $0x28] sm:$0xff]
      %v290 = vld [vmem:[%s276 + $0x30] sm:$0xff]
      %v291 = vld [vmem:[%s276 + $0x38] sm:$0xff]
      %v292 = vld [vmem:[%s276 + $0x40] sm:$0xff]
      %v293 = vld [vmem:[%s276 + $0x48] sm:$0xff]
      %v294 = vld [vmem:[%s276 + $0x50] sm:$0xff]
      %v295 = vld [vmem:[%s276 + $0x58] sm:$0xff]
      %v296 = vld [vmem:[%s276 + $0x60] sm:$0xff]
      %v297 = vld [vmem:[%s276 + $0x68] sm:$0xff]
      %v298 = vld [vmem:[%s276 + $0x70] sm:$0xff]
      %v299 = vld [vmem:[%s276 + $0x78] sm:$0xff]
      %v300 = vld [vmem:[%s1] sm:$0xff]
      %v301 = vld [vmem:[%s1 + $0x8] sm:$0xff]
      %v302 = vld [vmem:[%s1 + $0x10] sm:$0xff]
      %v303 = vld [vmem:[%s1 + $0x18] sm:$0xff]
      %v304 = vld [vmem:[%s2] sm:$0x1]
      %v306 = vlaneseq
      %v307 = vshrl.u32 %v306, 7
      %v308 = vsub.s32 0, %v307
      %v309 = vrot.slane %v304, %v308
      %vm311 = vcmask 261120
      %v313 = vsel %vm311, %v284, 0
      %v316 = vsel %vm311, %v285, 0
      %v319 = vsel %vm311, %v286, 0
      %v322 = vsel %vm311, %v287, 0
      %v325 = vsel %vm311, %v288, 0
      %v328 = vsel %vm311, %v289, 0
      %v331 = vsel %vm311, %v290, 0
      %v334 = vsel %vm311, %v291, 0
      %v337 = vsel %vm311, %v292, 0
      %v340 = vsel %vm311, %v293, 0
      %v343 = vsel %vm311, %v294, 0
      %v346 = vsel %vm311, %v295, 0
      %v349 = vsel %vm311, %v296, 0
      %v352 = vsel %vm311, %v297, 0
      %v355 = vsel %vm311, %v298, 0
      %v358 = vsel %vm311, %v299, 0
      %360 = vmatprep.subr.mxu0 0.0
      %361 = vmatpush1.msra.mxu0 0.0
      %362 = vmatprep.subr.mxu0 0.0
      %363 = vmatpush1.msra.mxu0 0.0
      %364 = vmatprep.subr.mxu0 0.0
      %365 = vmatpush1.msra.mxu0 0.0
      %366 = vmatprep.subr.mxu0 0.0
      %367 = vmatpush1.msra.mxu0 0.0
      %368 = vmatprep.subr.mxu0 0.0
      %369 = vmatpush1.msra.mxu0 0.0
      %370 = vmatprep.subr.mxu0 0.0
      %371 = vmatpush1.msra.mxu0 0.0
      %372 = vmatprep.subr.mxu0 0.0
      %373 = vmatpush1.msra.mxu0 0.0
      %374 = vmatprep.subr.mxu0 0.0
      %375 = vmatpush1.msra.mxu0 0.0
      %376 = vmatprep.subr.mxu0 0.0
      %377 = vmatpush1.msra.mxu0 0.0
      %378 = vmatprep.subr.mxu0 0.0
      %379 = vmatpush1.msra.mxu0 0.0
      %380 = vmatprep.subr.mxu0 0.0
      %381 = vmatpush1.msra.mxu0 0.0
      %382 = vmatprep.subr.mxu0 0.0
      %383 = vmatpush1.msra.mxu0 0.0
      %384 = vmatprep.subr.mxu0 0.0
      %385 = vmatpush1.msra.mxu0 %v303
      %386 = vmatprep.subr.mxu0 0.0
      %387 = vmatpush1.msra.mxu0 %v302
      %388 = vmatprep.subr.mxu0 0.0
      %389 = vmatpush1.msra.mxu0 %v301
      %390 = vmatprep.subr.mxu0 0.0
      %391 = vmatpush1.msra.mxu0 %v300
      %392 = vmatprep.subr.mxu0 0.0
      %393 = vmatpush2.msra.mxu0 0.0
      %394 = vmatprep.subr.mxu0 0.0
      %395 = vmatpush2.msra.mxu0 0.0
      %396 = vmatprep.subr.mxu0 0.0
      %397 = vmatpush2.msra.mxu0 0.0
      %398 = vmatprep.subr.mxu0 0.0
      %399 = vmatpush2.msra.mxu0 0.0
      %400 = vmatprep.subr.mxu0 0.0
      %401 = vmatpush2.msra.mxu0 0.0
      %402 = vmatprep.subr.mxu0 0.0
      %403 = vmatpush2.msra.mxu0 0.0
      %404 = vmatprep.subr.mxu0 0.0
      %405 = vmatpush2.msra.mxu0 0.0
      %406 = vmatprep.subr.mxu0 0.0
      %407 = vmatpush2.msra.mxu0 0.0
      %408 = vmatprep.subr.mxu0 0.0
      %409 = vmatpush2.msra.mxu0 0.0
      %410 = vmatprep.subr.mxu0 0.0
      %411 = vmatpush2.msra.mxu0 0.0
      %412 = vmatprep.subr.mxu0 0.0
      %413 = vmatpush2.msra.mxu0 0.0
      %414 = vmatprep.subr.mxu0 0.0
      %415 = vmatpush2.msra.mxu0 0.0
      %416 = vmatprep.subr.mxu0 0.0
      %417 = vmatpush2.msra.mxu0 0.0
      %418 = vmatprep.subr.mxu0 0.0
      %419 = vmatpush2.msra.mxu0 0.0
      %420 = vmatprep.subr.mxu0 0.0
      %421 = vmatpush2.msra.mxu0 0.0
      %422 = vmatprep.subr.mxu0 0.0
      %423 = vmatpush2.msra.mxu0 0.0
      %424 = vmatprep.mubr.f32.mxu0 0.0
      %425 = vmatmul.mubr.f32.gmra.mxu0 %v313
      %v426 = vpop.f32.mrf.mxu0
      %v427 = vadd.f32 %v309, %v426
      %v428 = vpop.f32.mrf.mxu0
      %429 = vmatprep.mubr.f32.mxu0 0.0
      %430 = vmatmul.mubr.f32.gmra.mxu0 %v316
      %v431 = vpop.f32.mrf.mxu0
      %v432 = vadd.f32 %v309, %v431
      %v433 = vpop.f32.mrf.mxu0
      %434 = vmatprep.mubr.f32.mxu0 0.0
      %435 = vmatmul.mubr.f32.gmra.mxu0 %v319
      %v436 = vpop.f32.mrf.mxu0
      %v437 = vadd.f32 %v309, %v436
      %v438 = vpop.f32.mrf.mxu0
      %439 = vmatprep.mubr.f32.mxu0 0.0
      %440 = vmatmul.mubr.f32.gmra.mxu0 %v322
      %v441 = vpop.f32.mrf.mxu0
      %v442 = vadd.f32 %v309, %v441
      %v443 = vpop.f32.mrf.mxu0
      %444 = vmatprep.mubr.f32.mxu0 0.0
      %445 = vmatmul.mubr.f32.gmra.mxu0 %v325
      %v446 = vpop.f32.mrf.mxu0
      %v447 = vadd.f32 %v309, %v446
      %v448 = vpop.f32.mrf.mxu0
      %449 = vmatprep.mubr.f32.mxu0 0.0
      %450 = vmatmul.mubr.f32.gmra.mxu0 %v328
      %v451 = vpop.f32.mrf.mxu0
      %v452 = vadd.f32 %v309, %v451
      %v453 = vpop.f32.mrf.mxu0
      %454 = vmatprep.mubr.f32.mxu0 0.0
      %455 = vmatmul.mubr.f32.gmra.mxu0 %v331
      %v456 = vpop.f32.mrf.mxu0
      %v457 = vadd.f32 %v309, %v456
      %v458 = vpop.f32.mrf.mxu0
      %459 = vmatprep.mubr.f32.mxu0 0.0
      %460 = vmatmul.mubr.f32.gmra.mxu0 %v334
      %v461 = vpop.f32.mrf.mxu0
      %v462 = vadd.f32 %v309, %v461
      %v463 = vpop.f32.mrf.mxu0
      %464 = vmatprep.mubr.f32.mxu0 0.0
      %465 = vmatmul.mubr.f32.gmra.mxu0 %v337
      %v466 = vpop.f32.mrf.mxu0
      %v467 = vadd.f32 %v309, %v466
      %v468 = vpop.f32.mrf.mxu0
      %469 = vmatprep.mubr.f32.mxu0 0.0
      %470 = vmatmul.mubr.f32.gmra.mxu0 %v340
      %v471 = vpop.f32.mrf.mxu0
      %v472 = vadd.f32 %v309, %v471
      %v473 = vpop.f32.mrf.mxu0
      %474 = vmatprep.mubr.f32.mxu0 0.0
      %475 = vmatmul.mubr.f32.gmra.mxu0 %v343
      %v476 = vpop.f32.mrf.mxu0
      %v477 = vadd.f32 %v309, %v476
      %v478 = vpop.f32.mrf.mxu0
      %479 = vmatprep.mubr.f32.mxu0 0.0
      %480 = vmatmul.mubr.f32.gmra.mxu0 %v346
      %v481 = vpop.f32.mrf.mxu0
      %v482 = vadd.f32 %v309, %v481
      %v483 = vpop.f32.mrf.mxu0
      %484 = vmatprep.mubr.f32.mxu0 0.0
      %485 = vmatmul.mubr.f32.gmra.mxu0 %v349
      %v486 = vpop.f32.mrf.mxu0
      %v487 = vadd.f32 %v309, %v486
      %v488 = vpop.f32.mrf.mxu0
      %489 = vmatprep.mubr.f32.mxu0 0.0
      %490 = vmatmul.mubr.f32.gmra.mxu0 %v352
      %v491 = vpop.f32.mrf.mxu0
      %v492 = vadd.f32 %v309, %v491
      %v493 = vpop.f32.mrf.mxu0
      %494 = vmatprep.mubr.f32.mxu0 0.0
      %495 = vmatmul.mubr.f32.gmra.mxu0 %v355
      %v496 = vpop.f32.mrf.mxu0
      %v497 = vadd.f32 %v309, %v496
      %v498 = vpop.f32.mrf.mxu0
      %499 = vmatprep.mubr.f32.mxu0 0.0
      %500 = vmatmul.mubr.f32.gmra.mxu0 %v358
      %v501 = vpop.f32.mrf.mxu0
      %v502 = vadd.f32 %v309, %v501
      %v503 = vpop.f32.mrf.mxu0
      %504 = vdwg.mxu0
      %v505 = vmax.f32 %v427, 0.0
      %v506 = vmax.f32 %v432, 0.0
      %v507 = vmax.f32 %v437, 0.0
      %v508 = vmax.f32 %v442, 0.0
      %v509 = vmax.f32 %v447, 0.0
      %v510 = vmax.f32 %v452, 0.0
      %v511 = vmax.f32 %v457, 0.0
      %v512 = vmax.f32 %v462, 0.0
      %v513 = vmax.f32 %v467, 0.0
      %v514 = vmax.f32 %v472, 0.0
      %v515 = vmax.f32 %v477, 0.0
      %v516 = vmax.f32 %v482, 0.0
      %v517 = vmax.f32 %v487, 0.0
      %v518 = vmax.f32 %v492, 0.0
      %v519 = vmax.f32 %v497, 0.0
      %v520 = vmax.f32 %v502, 0.0
      %v521 = vld [vmem:[%s3] sm:$0xff]
      %v522 = vld [vmem:[%s3 + $0x8] sm:$0xff]
      %v523 = vld [vmem:[%s3 + $0x10] sm:$0xff]
      %v524 = vld [vmem:[%s3 + $0x18] sm:$0xff]
      %v525 = vld [vmem:[%s3 + $0x20] sm:$0xff]
      %v526 = vld [vmem:[%s3 + $0x28] sm:$0xff]
      %v527 = vld [vmem:[%s3 + $0x30] sm:$0xff]
      %v528 = vld [vmem:[%s3 + $0x38] sm:$0xff]
      %v529 = vld [vmem:[%s3 + $0x40] sm:$0xff]
      %v530 = vld [vmem:[%s3 + $0x48] sm:$0xff]
      %v531 = vld [vmem:[%s3 + $0x50] sm:$0xff]
      %v532 = vld [vmem:[%s3 + $0x58] sm:$0xff]
      %v533 = vld [vmem:[%s3 + $0x60] sm:$0xff]
      %v534 = vld [vmem:[%s3 + $0x68] sm:$0xff]
      %v535 = vld [vmem:[%s3 + $0x70] sm:$0xff]
      %v536 = vld [vmem:[%s3 + $0x78] sm:$0xff]
      %v537 = vld [vmem:[%s4] sm:$0x1]
      %v539 = vlaneseq
      %v540 = vshrl.u32 %v539, 7
      %v541 = vsub.s32 0, %v540
      %v542 = vrot.slane %v537, %v541
      %544 = vmatprep.subr.mxu0 0.0
      %545 = vmatpush1.msra.mxu0 %v536
      %546 = vmatprep.subr.mxu0 0.0
      %547 = vmatpush1.msra.mxu0 %v535
      %548 = vmatprep.subr.mxu0 0.0
      %549 = vmatpush1.msra.mxu0 %v534
      %550 = vmatprep.subr.mxu0 0.0
      %551 = vmatpush1.msra.mxu0 %v533
      %552 = vmatprep.subr.mxu0 0.0
      %553 = vmatpush1.msra.mxu0 %v532
      %554 = vmatprep.subr.mxu0 0.0
      %555 = vmatpush1.msra.mxu0 %v531
      %556 = vmatprep.subr.mxu0 0.0
      %557 = vmatpush1.msra.mxu0 %v530
      %558 = vmatprep.subr.mxu0 0.0
      %559 = vmatpush1.msra.mxu0 %v529
      %560 = vmatprep.subr.mxu0 0.0
      %561 = vmatpush1.msra.mxu0 %v528
      %562 = vmatprep.subr.mxu0 0.0
      %563 = vmatpush1.msra.mxu0 %v527
      %564 = vmatprep.subr.mxu0 0.0
      %565 = vmatpush1.msra.mxu0 %v526
      %566 = vmatprep.subr.mxu0 0.0
      %567 = vmatpush1.msra.mxu0 %v525
      %568 = vmatprep.subr.mxu0 0.0
      %569 = vmatpush1.msra.mxu0 %v524
      %570 = vmatprep.subr.mxu0 0.0
      %571 = vmatpush1.msra.mxu0 %v523
      %572 = vmatprep.subr.mxu0 0.0
      %573 = vmatpush1.msra.mxu0 %v522
      %574 = vmatprep.subr.mxu0 0.0
      %575 = vmatpush1.msra.mxu0 %v521
      %576 = vmatprep.subr.mxu0 0.0
      %577 = vmatpush2.msra.mxu0 0.0
      %578 = vmatprep.subr.mxu0 0.0
      %579 = vmatpush2.msra.mxu0 0.0
      %580 = vmatprep.subr.mxu0 0.0
      %581 = vmatpush2.msra.mxu0 0.0
      %582 = vmatprep.subr.mxu0 0.0
      %583 = vmatpush2.msra.mxu0 0.0
      %584 = vmatprep.subr.mxu0 0.0
      %585 = vmatpush2.msra.mxu0 0.0
      %586 = vmatprep.subr.mxu0 0.0
      %587 = vmatpush2.msra.mxu0 0.0
      %588 = vmatprep.subr.mxu0 0.0
      %589 = vmatpush2.msra.mxu0 0.0
      %590 = vmatprep.subr.mxu0 0.0
      %591 = vmatpush2.msra.mxu0 0.0
      %592 = vmatprep.subr.mxu0 0.0
      %593 = vmatpush2.msra.mxu0 0.0
      %594 = vmatprep.subr.mxu0 0.0
      %595 = vmatpush2.msra.mxu0 0.0
      %596 = vmatprep.subr.mxu0 0.0
      %597 = vmatpush2.msra.mxu0 0.0
      %598 = vmatprep.subr.mxu0 0.0
      %599 = vmatpush2.msra.mxu0 0.0
      %600 = vmatprep.subr.mxu0 0.0
      %601 = vmatpush2.msra.mxu0 0.0
      %602 = vmatprep.subr.mxu0 0.0
      %603 = vmatpush2.msra.mxu0 0.0
      %604 = vmatprep.subr.mxu0 0.0
      %605 = vmatpush2.msra.mxu0 0.0
      %606 = vmatprep.subr.mxu0 0.0
      %607 = vmatpush2.msra.mxu0 0.0
      %608 = vmatprep.mubr.f32.mxu0 0.0
      %609 = vmatmul.mubr.f32.gmra.mxu0 %v505
      %v610 = vpop.f32.mrf.mxu0
      %v611 = vadd.f32 %v542, %v610
      %v612 = vpop.f32.mrf.mxu0
      %613 = vmatprep.mubr.f32.mxu0 0.0
      %614 = vmatmul.mubr.f32.gmra.mxu0 %v506
      %v615 = vpop.f32.mrf.mxu0
      %v616 = vadd.f32 %v542, %v615
      %v617 = vpop.f32.mrf.mxu0
      %618 = vmatprep.mubr.f32.mxu0 0.0
      %619 = vmatmul.mubr.f32.gmra.mxu0 %v507
      %v620 = vpop.f32.mrf.mxu0
      %v621 = vadd.f32 %v542, %v620
      %v622 = vpop.f32.mrf.mxu0
      %623 = vmatprep.mubr.f32.mxu0 0.0
      %624 = vmatmul.mubr.f32.gmra.mxu0 %v508
      %v625 = vpop.f32.mrf.mxu0
      %v626 = vadd.f32 %v542, %v625
      %v627 = vpop.f32.mrf.mxu0
      %628 = vmatprep.mubr.f32.mxu0 0.0
      %629 = vmatmul.mubr.f32.gmra.mxu0 %v509
      %v630 = vpop.f32.mrf.mxu0
      %v631 = vadd.f32 %v542, %v630
      %v632 = vpop.f32.mrf.mxu0
      %633 = vmatprep.mubr.f32.mxu0 0.0
      %634 = vmatmul.mubr.f32.gmra.mxu0 %v510
      %v635 = vpop.f32.mrf.mxu0
      %v636 = vadd.f32 %v542, %v635
      %v637 = vpop.f32.mrf.mxu0
      %638 = vmatprep.mubr.f32.mxu0 0.0
      %639 = vmatmul.mubr.f32.gmra.mxu0 %v511
      %v640 = vpop.f32.mrf.mxu0
      %v641 = vadd.f32 %v542, %v640
      %v642 = vpop.f32.mrf.mxu0
      %643 = vmatprep.mubr.f32.mxu0 0.0
      %644 = vmatmul.mubr.f32.gmra.mxu0 %v512
      %v645 = vpop.f32.mrf.mxu0
      %v646 = vadd.f32 %v542, %v645
      %v647 = vpop.f32.mrf.mxu0
      %648 = vmatprep.mubr.f32.mxu0 0.0
      %649 = vmatmul.mubr.f32.gmra.mxu0 %v513
      %v650 = vpop.f32.mrf.mxu0
      %v651 = vadd.f32 %v542, %v650
      %v652 = vpop.f32.mrf.mxu0
      %653 = vmatprep.mubr.f32.mxu0 0.0
      %654 = vmatmul.mubr.f32.gmra.mxu0 %v514
      %v655 = vpop.f32.mrf.mxu0
      %v656 = vadd.f32 %v542, %v655
      %v657 = vpop.f32.mrf.mxu0
      %658 = vmatprep.mubr.f32.mxu0 0.0
      %659 = vmatmul.mubr.f32.gmra.mxu0 %v515
      %v660 = vpop.f32.mrf.mxu0
      %v661 = vadd.f32 %v542, %v660
      %v662 = vpop.f32.mrf.mxu0
      %663 = vmatprep.mubr.f32.mxu0 0.0
      %664 = vmatmul.mubr.f32.gmra.mxu0 %v516
      %v665 = vpop.f32.mrf.mxu0
      %v666 = vadd.f32 %v542, %v665
      %v667 = vpop.f32.mrf.mxu0
      %668 = vmatprep.mubr.f32.mxu0 0.0
      %669 = vmatmul.mubr.f32.gmra.mxu0 %v517
      %v670 = vpop.f32.mrf.mxu0
      %v671 = vadd.f32 %v542, %v670
      %v672 = vpop.f32.mrf.mxu0
      %673 = vmatprep.mubr.f32.mxu0 0.0
      %674 = vmatmul.mubr.f32.gmra.mxu0 %v518
      %v675 = vpop.f32.mrf.mxu0
      %v676 = vadd.f32 %v542, %v675
      %v677 = vpop.f32.mrf.mxu0
      %678 = vmatprep.mubr.f32.mxu0 0.0
      %679 = vmatmul.mubr.f32.gmra.mxu0 %v519
      %v680 = vpop.f32.mrf.mxu0
      %v681 = vadd.f32 %v542, %v680
      %v682 = vpop.f32.mrf.mxu0
      %683 = vmatprep.mubr.f32.mxu0 0.0
      %684 = vmatmul.mubr.f32.gmra.mxu0 %v520
      %v685 = vpop.f32.mrf.mxu0
      %v686 = vadd.f32 %v542, %v685
      %v687 = vpop.f32.mrf.mxu0
      %688 = vdwg.mxu0
      %v689 = vmax.f32 %v611, 0.0
      %v690 = vmax.f32 %v616, 0.0
      %v691 = vmax.f32 %v621, 0.0
      %v692 = vmax.f32 %v626, 0.0
      %v693 = vmax.f32 %v631, 0.0
      %v694 = vmax.f32 %v636, 0.0
      %v695 = vmax.f32 %v641, 0.0
      %v696 = vmax.f32 %v646, 0.0
      %v697 = vmax.f32 %v651, 0.0
      %v698 = vmax.f32 %v656, 0.0
      %v699 = vmax.f32 %v661, 0.0
      %v700 = vmax.f32 %v666, 0.0
      %v701 = vmax.f32 %v671, 0.0
      %v702 = vmax.f32 %v676, 0.0
      %v703 = vmax.f32 %v681, 0.0
      %v704 = vmax.f32 %v686, 0.0
      %v705 = vld [vmem:[%s5] sm:$0x1]
      %v706 = vld [vmem:[#allocation2] sm:$0x1]
      %v708 = vlaneseq
      %v709 = vshrl.u32 %v708, 7
      %v710 = vsub.s32 0, %v709
      %v711 = vrot.slane %v705, %v710
      %v713 = vmul.f32 %v689, %v711
      %v714 = vmul.f32 %v690, %v711
      %v715 = vmul.f32 %v691, %v711
      %v716 = vmul.f32 %v692, %v711
      %v717 = vmul.f32 %v693, %v711
      %v718 = vmul.f32 %v694, %v711
      %v719 = vmul.f32 %v695, %v711
      %v720 = vmul.f32 %v696, %v711
      %v721 = vmul.f32 %v697, %v711
      %v722 = vmul.f32 %v698, %v711
      %v723 = vmul.f32 %v699, %v711
      %v724 = vmul.f32 %v700, %v711
      %v725 = vmul.f32 %v701, %v711
      %v726 = vmul.f32 %v702, %v711
      %v727 = vmul.f32 %v703, %v711
      %v728 = vmul.f32 %v704, %v711
      %729 = vadd.xlane.f32.xlu0 %v713
      %v730 = vpop.xlane.xlu0 %729
      %731 = vadd.xlane.f32.xlu0 %v714
      %v732 = vpop.xlane.xlu0 %731
      %733 = vadd.xlane.f32.xlu0 %v715
      %v734 = vpop.xlane.xlu0 %733
      %735 = vadd.xlane.f32.xlu0 %v716
      %v736 = vpop.xlane.xlu0 %735
      %737 = vadd.xlane.f32.xlu0 %v717
      %v738 = vpop.xlane.xlu0 %737
      %739 = vadd.xlane.f32.xlu0 %v718
      %v740 = vpop.xlane.xlu0 %739
      %741 = vadd.xlane.f32.xlu0 %v719
      %v742 = vpop.xlane.xlu0 %741
      %743 = vadd.xlane.f32.xlu0 %v720
      %v744 = vpop.xlane.xlu0 %743
      %745 = vadd.xlane.f32.xlu0 %v721
      %v746 = vpop.xlane.xlu0 %745
      %747 = vadd.xlane.f32.xlu0 %v722
      %v748 = vpop.xlane.xlu0 %747
      %749 = vadd.xlane.f32.xlu0 %v723
      %v750 = vpop.xlane.xlu0 %749
      %751 = vadd.xlane.f32.xlu0 %v724
      %v752 = vpop.xlane.xlu0 %751
      %753 = vadd.xlane.f32.xlu0 %v725
      %v754 = vpop.xlane.xlu0 %753
      %755 = vadd.xlane.f32.xlu0 %v726
      %v756 = vpop.xlane.xlu0 %755
      %757 = vadd.xlane.f32.xlu0 %v727
      %v758 = vpop.xlane.xlu0 %757
      %759 = vadd.xlane.f32.xlu0 %v728
      %v760 = vpop.xlane.xlu0 %759
      %v762 = vlaneseq
      %v763 = vshrl.u32 %v762, 7
      %v764 = vsub.s32 0, %v763
      %v765 = vrot.slane %v706, %v764
      %v767 = vadd.f32 %v730, %v765
      %v768 = vadd.f32 %v732, %v765
      %v769 = vadd.f32 %v734, %v765
      %v770 = vadd.f32 %v736, %v765
      %v771 = vadd.f32 %v738, %v765
      %v772 = vadd.f32 %v740, %v765
      %v773 = vadd.f32 %v742, %v765
      %v774 = vadd.f32 %v744, %v765
      %v775 = vadd.f32 %v746, %v765
      %v776 = vadd.f32 %v748, %v765
      %v777 = vadd.f32 %v750, %v765
      %v778 = vadd.f32 %v752, %v765
      %v779 = vadd.f32 %v754, %v765
      %v780 = vadd.f32 %v756, %v765
      %v781 = vadd.f32 %v758, %v765
      %v782 = vadd.f32 %v760, %v765
      %vm783 = vcmask 7168
      %784 = vst.msk [vmem:[%s282] sm:$0xff] %vm783, %v767
      %785 = vst.msk [vmem:[%s282 + $0x8] sm:$0xff] %vm783, %v768
      %786 = vst.msk [vmem:[%s282 + $0x10] sm:$0xff] %vm783, %v769
      %787 = vst.msk [vmem:[%s282 + $0x18] sm:$0xff] %vm783, %v770
      %788 = vst.msk [vmem:[%s282 + $0x20] sm:$0xff] %vm783, %v771
      %789 = vst.msk [vmem:[%s282 + $0x28] sm:$0xff] %vm783, %v772
      %790 = vst.msk [vmem:[%s282 + $0x30] sm:$0xff] %vm783, %v773
      %791 = vst.msk [vmem:[%s282 + $0x38] sm:$0xff] %vm783, %v774
      %792 = vst.msk [vmem:[%s282 + $0x40] sm:$0xff] %vm783, %v775
      %793 = vst.msk [vmem:[%s282 + $0x48] sm:$0xff] %vm783, %v776
      %794 = vst.msk [vmem:[%s282 + $0x50] sm:$0xff] %vm783, %v777
      %795 = vst.msk [vmem:[%s282 + $0x58] sm:$0xff] %vm783, %v778
      %796 = vst.msk [vmem:[%s282 + $0x60] sm:$0xff] %vm783, %v779
      %797 = vst.msk [vmem:[%s282 + $0x68] sm:$0xff] %vm783, %v780
      %798 = vst.msk [vmem:[%s282 + $0x70] sm:$0xff] %vm783, %v781
      %799 = vst.msk [vmem:[%s282 + $0x78] sm:$0xff] %vm783, %v782
      %s800 = smul.u32 16, %s20
      %p801 = scmp.lt.s32.totalorder %s800, 31
      %s802 = scalar_select %p801, %s800, 31
      %s803 = smul.addr %s802, 8
      %s804 = scalar_lea.vmem %s7, %s803
      // Predicated region
      $region49: #{nn_module_forward.1} parent=47 // pred_check
        %p805 = pneg %p190
      $region50: #{nn_module_forward.1} parent=47 // pred_check_branch
        %807 = sbr.rel (%p805) target = $region52
      $region51: #{nn_module_forward.1} parent=47 // pred_region
        %s808 = smul.u32 16, %s20
      $region52: #{nn_module_forward.1} parent=47 // pred_fallthru
        _
    $region48: #{nn_module_forward.1} parent=5 // pred_fallthru
      _
    %p809 = scmp.le.s32.totalorder 2, %s15
    // Predicated region
    $region53: #{nn_module_forward.1} parent=5 // pred_check
      %p810 = pneg %p809
    $region54: #{nn_module_forward.1} parent=5 // pred_check_branch
      %812 = sbr.rel (%p810) target = $region56
    $region55: #{nn_module_forward.1} parent=5 // pred_region
      %s813 = ssub.s32 %s15, 2
      // Predicated region
      $region57: #{nn_module_forward.1} parent=55 // pred_check
        %p814 = pneg %p196
      $region58: #{nn_module_forward.1} parent=55 // pred_check_branch
        %816 = sbr.rel (%p814) target = $region60
      $region59: #{nn_module_forward.1} parent=55 // pred_region
        %s817 = smul.u32 16, %s21
        %p818 = scmp.lt.s32.totalorder %s817, 31
        %s819 = scalar_select %p818, %s817, 31
        %s820 = smul.addr %s819, 8
        %s821 = scalar_lea.vmem %s7, %s820
      $region60: #{nn_module_forward.1} parent=55 // pred_fallthru
        _
    $region56: #{nn_module_forward.1} parent=5 // pred_fallthru
      _
  $region6: #{nn_module_forward.1} parent=0 // loop_footer
    %s19 = sadd.s32 1, %s15
  $region7: #{nn_module_forward.1} parent=0 // loop_footer_branch
    %14 = sbr.rel target = $region3
  $region8: #{nn_module_forward.1} parent=0 // loop_exit
    _

</llo_original>
